<compile_context>
chip_gen: v7x
topology: tpu7x:2x2x1
jax: 0.10.0
libtpu: 0.0.40
codegen_flags: <defaults>
</compile_context>

<pallas_src>
import functools

import jax
import jax.numpy as jnp
import numpy as np
from jax.experimental import pallas as pl
from jax.experimental.pallas import tpu as pltpu


def _st_attention_kernel(x_ref, w1_ref, w2_ref, cw_ref, o_ref, *, kernel_size):
    """One (TB, C, L) batch tile per grid step.

    x_ref : (TB, C, L) VMEM
    w1_ref: (C, H)     VMEM   (= Linear1.weight.T, H = C // reduction)
    w2_ref: (H, C)     VMEM   (= Linear2.weight.T)
    cw_ref: (2*K,)     SMEM   flat conv1d weight: [avg taps..., max taps...]
    o_ref : (TB, C, L) VMEM
    """
    x = x_ref[...]                                   # (TB, C, L)
    TB, C, L = x.shape
    K = kernel_size
    pad = (K - 1) // 2

    # ---------------- Channel attention (batched over TB) ----------------
    # AdaptiveAvgPool1d(1): mean over the length (lane) axis -> (TB, C).
    y = jnp.mean(x, axis=2)                          # (TB, C)
    h = jnp.maximum(
        jnp.dot(y, w1_ref[...], preferred_element_type=jnp.float32), 0.0)   # (TB, H)
    s = jax.nn.sigmoid(
        jnp.dot(h, w2_ref[...], preferred_element_type=jnp.float32))        # (TB, C)

    # Stage x_ca in the output block so x can die — cuts one live full-tile
    # temporary (matters for the v7x 64 MiB VMEM budget).
    o_ref[...] = (x * s[:, :, None]).astype(o_ref.dtype)
    xc = o_ref[...].astype(jnp.float32)              # (TB, C, L)

    # ---------------- Spatial attention (batched over TB) ----------------
    avg = jnp.mean(xc, axis=1)                       # (TB, L)  cross-sublane reduce
    mx = jnp.max(xc, axis=1)                         # (TB, L)

    # Conv1d(2 -> 1, kernel_size=K, padding=pad, bias=False), unrolled over the
    # K taps.  The two input rows are combined with their tap weights *before*
    # the shift (roll is linear) so there is a single roll + mask per tap; the
    # centre tap skips the roll/mask entirely.
    lane = jax.lax.broadcasted_iota(jnp.int32, (1, L), 1)
    acc = jnp.zeros((TB, L), jnp.float32)
    for k in range(K):
        shift = k - pad                              # out[l] += w[:,k] * in[:, l+shift]
        ck = cw_ref[k] * avg + cw_ref[K + k] * mx    # (TB, L)
        if shift == 0:
            acc = acc + ck
        else:
            mask = (lane + shift >= 0) & (lane + shift < L)
            rolled = pltpu.roll(ck, (-shift) % L, axis=1)
            acc = acc + jnp.where(mask, rolled, 0.0)

    attn = jax.nn.sigmoid(acc)                       # (TB, L)  one EUP pass
    o_ref[...] = (xc * attn[:, None, :]).astype(o_ref.dtype)   # single lane-dense store


def _pick_tb(B, C, L, *, vmem_budget_bytes=40 * 1024 * 1024, min_grid=4):
    """Largest batch tile that keeps ~6x(TB*C*L*4) under the VMEM budget while
    leaving >= min_grid grid steps (>= 2 per TensorCore on v7x megacore)."""
    bytes_per_sample = C * L * 4
    tb_vmem = max(1, vmem_budget_bytes // (6 * bytes_per_sample))
    tb = min(B, tb_vmem)
    if B >= min_grid:
        tb = min(tb, max(1, B // min_grid))
    return max(1, tb)


def spatio_temporal_attention(x, w1, w2, conv_w, *, kernel_size=7, block_b=None):
    """SpatioTemporalAttention forward.

    x      : (B, C, L) float32
    w1     : (H, C)  = ChannelAttention Linear(C -> H, bias=False).weight  (PyTorch layout)
    w2     : (C, H)  = ChannelAttention Linear(H -> C, bias=False).weight
    conv_w : (2, K)  = SpatialAttention Conv1d(2 -> 1, K, bias=False).weight[0]
    """
    B, C, L = x.shape
    H = w1.shape[0]
    K = kernel_size
    # TODO(synk): pad=(K-1)//2 matches PyTorch only for odd kernel_size.

    tb = _pick_tb(B, C, L) if block_b is None else max(1, min(block_b, B))
    b_padded = ((B + tb - 1) // tb) * tb
    padded = b_padded != B
    xp = jnp.pad(x, ((0, b_padded - B), (0, 0), (0, 0))) if padded else x

    w1_t = jnp.transpose(w1)                      # (C, H)  — pre-transpose outside the kernel
    w2_t = jnp.transpose(w2)                      # (H, C)
    cw_flat = conv_w.reshape(2 * K)               # [avg taps..., max taps...]  (1-D SMEM)

    kern = functools.partial(_st_attention_kernel, kernel_size=K)
    call = pl.pallas_call(
        kern,
        out_shape=jax.ShapeDtypeStruct((b_padded, C, L), x.dtype),
        grid_spec=pltpu.PrefetchScalarGridSpec(
            num_scalar_prefetch=0,
            grid=(b_padded // tb,),
            in_specs=[
                pl.BlockSpec((tb, C, L), lambda i: (i, 0, 0)),
                pl.BlockSpec((C, H), lambda i: (0, 0)),
                pl.BlockSpec((H, C), lambda i: (0, 0)),
                pl.BlockSpec(memory_space=pltpu.MemorySpace.SMEM),
            ],
            out_specs=pl.BlockSpec((tb, C, L), lambda i: (i, 0, 0)),
        ),
        compiler_params=pltpu.CompilerParams(
            dimension_semantics=("parallel",),
            vmem_limit_bytes=48 * 1024 * 1024,
        ),
        # Only alias when xp is an internal padded temporary (never the caller's x).
        input_output_aliases=({0: 0} if padded else {}),
    )
    out = call(xp, w1_t, w2_t, cw_flat)
    return out[:B] if padded else out


def _reference(x, w1, w2, conv_w, kernel_size=7):
    """Pure-JAX reference mirroring the PyTorch forward."""
    pad = (kernel_size - 1) // 2
    # Channel attention
    y = jnp.mean(x, axis=2)                          # (B, C)
    h = jnp.maximum(y @ w1.T, 0.0)                   # (B, H)
    s = jax.nn.sigmoid(h @ w2.T)                     # (B, C)
    x_ca = x * s[:, :, None]
    # Spatial attention
    avg = jnp.mean(x_ca, axis=1, keepdims=True)      # (B, 1, L)
    mx = jnp.max(x_ca, axis=1, keepdims=True)        # (B, 1, L)
    concat = jnp.concatenate([avg, mx], axis=1)      # (B, 2, L)
    out = jax.lax.conv_general_dilated(
        concat, conv_w[None, :, :],                  # (1, 2, K)
        window_strides=(1,), padding=[(pad, pad)],
        dimension_numbers=("NCH", "OIH", "NCH"))
    attn = jax.nn.sigmoid(out)                       # (B, 1, L)
    return x_ca * attn


if __name__ == "__main__":
    B, C, L = 16, 32, 128
    reduction, K = 16, 7
    H = C // reduction

    key = jax.random.PRNGKey(0)
    kx, k1, k2, kc = jax.random.split(key, 4)
    x = jax.random.normal(kx, (B, C, L), dtype=jnp.float32)
    # Deterministic synthetic parameters in PyTorch layout.
    w1 = jax.random.normal(k1, (H, C), dtype=jnp.float32) * 0.1      # Linear(C->H).weight
    w2 = jax.random.normal(k2, (C, H), dtype=jnp.float32) * 0.1      # Linear(H->C).weight
    conv_w = jax.random.normal(kc, (2, K), dtype=jnp.float32) * 0.1  # Conv1d(2->1,K).weight[0]

    out = spatio_temporal_attention(x, w1, w2, conv_w, kernel_size=K)
    out = jax.block_until_ready(out)

    ref = jax.block_until_ready(_reference(x, w1, w2, conv_w, kernel_size=K))
    if not np.allclose(np.asarray(out), np.asarray(ref), atol=1e-5, rtol=1e-5):
        raise AssertionError("Pallas kernel does not match reference")
    print("KERNEL_OK")
</pallas_src>

<mosaic_0001>
module attributes {stable_mosaic.version = 11 : i64} {
  func.func @_st_attention_kernel(%arg0: i32, %arg1: memref<4x32x128xf32, #tpu.memory_space<vmem>>, %arg2: memref<32x2xf32, #tpu.memory_space<vmem>>, %arg3: memref<2x32xf32, #tpu.memory_space<vmem>>, %arg4: memref<14xf32, #tpu.memory_space<smem>>, %arg5: memref<4x32x128xf32, #tpu.memory_space<vmem>>) attributes {dimension_semantics = [#tpu.dimension_semantics<parallel>], iteration_bounds = array<i64: 4>, scalar_prefetch = 0 : i64, scratch_operands = 0 : i64, tpu.core_type = #tpu.core_type<tc>, window_params = [{transform_indices = @transform_0, window_bounds = array<i64: 4, 32, 128>}, {pipeline_mode = #tpu.pipeline_mode<synchronous>, transform_indices = @transform_1, window_bounds = array<i64: 32, 2>}, {pipeline_mode = #tpu.pipeline_mode<synchronous>, transform_indices = @transform_2, window_bounds = array<i64: 2, 32>}, {transform_indices = @transform_3, window_bounds = array<i64: 14>}, {transform_indices = @transform_4, window_bounds = array<i64: 4, 32, 128>}]} {
    %c0 = arith.constant 0 : index
    %c0_0 = arith.constant 0 : index
    %c0_1 = arith.constant 0 : index
    %0 = vector.load %arg1[%c0, %c0_0, %c0_1] : memref<4x32x128xf32, #tpu.memory_space<vmem>>, vector<4x32x128xf32>
    %cst = arith.constant dense<0.000000e+00> : vector<4x32xf32>
    %1 = vector.multi_reduction <add>, %0, %cst [2] : vector<4x32x128xf32> to vector<4x32xf32>
    %cst_2 = arith.constant 1.280000e+02 : f32
    %2 = vector.broadcast %cst_2 : f32 to vector<4x32xf32>
    %3 = arith.divf %1, %2 : vector<4x32xf32>
    %c0_3 = arith.constant 0 : index
    %c0_4 = arith.constant 0 : index
    %4 = vector.load %arg2[%c0_3, %c0_4] : memref<32x2xf32, #tpu.memory_space<vmem>>, vector<32x2xf32>
    %cst_5 = arith.constant dense<0.000000e+00> : vector<4x2xf32>
    %5 = tpu.matmul %3, %4, %cst_5 {dimension_numbers = #tpu.dot_dimension_numbers<[1], [0], [0], [1], [0, 0, 1, 1], [], []>} : vector<4x32xf32>, vector<32x2xf32>, vector<4x2xf32> -> vector<4x2xf32>
    %cst_6 = arith.constant 0.000000e+00 : f32
    %6 = vector.broadcast %cst_6 : f32 to vector<4x2xf32>
    %7 = arith.maximumf %5, %6 : vector<4x2xf32>
    %c0_7 = arith.constant 0 : index
    %c0_8 = arith.constant 0 : index
    %8 = vector.load %arg3[%c0_7, %c0_8] : memref<2x32xf32, #tpu.memory_space<vmem>>, vector<2x32xf32>
    %cst_9 = arith.constant dense<0.000000e+00> : vector<4x32xf32>
    %9 = tpu.matmul %7, %8, %cst_9 {dimension_numbers = #tpu.dot_dimension_numbers<[1], [0], [0], [1], [0, 0, 1, 1], [], []>} : vector<4x2xf32>, vector<2x32xf32>, vector<4x32xf32> -> vector<4x32xf32>
    %10 = arith.negf %9 : vector<4x32xf32>
    %11 = math.exp %10 : vector<4x32xf32>
    %cst_10 = arith.constant 1.000000e+00 : f32
    %12 = vector.broadcast %cst_10 : f32 to vector<4x32xf32>
    %13 = arith.addf %12, %11 : vector<4x32xf32>
    %14 = arith.divf %12, %13 : vector<4x32xf32>
    %15 = vector.shape_cast %14 : vector<4x32xf32> to vector<4x32x1xf32>
    %16 = vector.broadcast %15 : vector<4x32x1xf32> to vector<4x32x128xf32>
    %17 = arith.mulf %0, %16 : vector<4x32x128xf32>
    %c0_11 = arith.constant 0 : index
    %c0_12 = arith.constant 0 : index
    %c0_13 = arith.constant 0 : index
    %18 = vector.load %arg5[%c0_11, %c0_12, %c0_13] : memref<4x32x128xf32, #tpu.memory_space<vmem>>, vector<4x32x128xf32>
    tpu.vector_store %arg5[%c0_11, %c0_12, %c0_13], %17 {strides = array<i32>} : memref<4x32x128xf32, #tpu.memory_space<vmem>>, vector<4x32x128xf32>,
    %c0_14 = arith.constant 0 : index
    %c0_15 = arith.constant 0 : index
    %c0_16 = arith.constant 0 : index
    %19 = vector.load %arg5[%c0_14, %c0_15, %c0_16] : memref<4x32x128xf32, #tpu.memory_space<vmem>>, vector<4x32x128xf32>
    %cst_17 = arith.constant dense<0.000000e+00> : vector<4x128xf32>
    %20 = vector.multi_reduction <add>, %19, %cst_17 [1] : vector<4x32x128xf32> to vector<4x128xf32>
    %cst_18 = arith.constant 3.200000e+01 : f32
    %21 = vector.broadcast %cst_18 : f32 to vector<4x128xf32>
    %22 = arith.divf %20, %21 : vector<4x128xf32>
    %cst_19 = arith.constant dense<0xFF800000> : vector<4x128xf32>
    %23 = vector.multi_reduction <maximumf>, %19, %cst_19 [1] : vector<4x32x128xf32> to vector<4x128xf32>
    %24 = tpu.iota {dimensions = array<i32: 1>} : vector<1x128xi32>
    %cst_20 = arith.constant 0.000000e+00 : f32
    %25 = vector.broadcast %cst_20 : f32 to vector<4x128xf32>
    %c0_21 = arith.constant 0 : index
    %26 = memref.load %arg4[%c0_21] : memref<14xf32, #tpu.memory_space<smem>>
    %27 = vector.broadcast %26 : f32 to vector<4x128xf32>
    %28 = arith.mulf %27, %22 : vector<4x128xf32>
    %c7 = arith.constant 7 : index
    %29 = memref.load %arg4[%c7] : memref<14xf32, #tpu.memory_space<smem>>
    %30 = vector.broadcast %29 : f32 to vector<4x128xf32>
    %31 = arith.mulf %30, %23 : vector<4x128xf32>
    %32 = arith.addf %28, %31 : vector<4x128xf32>
    %c-3_i32 = arith.constant -3 : i32
    %33 = vector.broadcast %c-3_i32 : i32 to vector<1x128xi32>
    %34 = arith.addi %24, %33 : vector<1x128xi32>
    %c0_i32 = arith.constant 0 : i32
    %35 = vector.broadcast %c0_i32 : i32 to vector<1x128xi32>
    %36 = arith.cmpi sge, %34, %35 : vector<1x128xi32>
    %c-3_i32_22 = arith.constant -3 : i32
    %37 = vector.broadcast %c-3_i32_22 : i32 to vector<1x128xi32>
    %38 = arith.addi %24, %37 : vector<1x128xi32>
    %c128_i32 = arith.constant 128 : i32
    %39 = vector.broadcast %c128_i32 : i32 to vector<1x128xi32>
    %40 = arith.cmpi slt, %38, %39 : vector<1x128xi32>
    %41 = arith.andi %36, %40 : vector<1x128xi1>
    %c3_i32 = arith.constant 3 : i32
    %42 = tpu.dynamic_rotate %32 by %c3_i32 dim 1 : vector<4x128xf32>, i32 -> vector<4x128xf32>
    %cst_23 = arith.constant 0.000000e+00 : f32
    %43 = vector.shape_cast %41 : vector<1x128xi1> to vector<1x128xi1>
    %44 = vector.broadcast %43 : vector<1x128xi1> to vector<4x128xi1>
    %45 = vector.broadcast %cst_23 : f32 to vector<4x128xf32>
    %46 = arith.select %44, %42, %45 : vector<4x128xi1>, vector<4x128xf32>
    %47 = arith.addf %25, %46 : vector<4x128xf32>
    %c1 = arith.constant 1 : index
    %48 = memref.load %arg4[%c1] : memref<14xf32, #tpu.memory_space<smem>>
    %49 = vector.broadcast %48 : f32 to vector<4x128xf32>
    %50 = arith.mulf %49, %22 : vector<4x128xf32>
    %c8 = arith.constant 8 : index
    %51 = memref.load %arg4[%c8] : memref<14xf32, #tpu.memory_space<smem>>
    %52 = vector.broadcast %51 : f32 to vector<4x128xf32>
    %53 = arith.mulf %52, %23 : vector<4x128xf32>
    %54 = arith.addf %50, %53 : vector<4x128xf32>
    %c-2_i32 = arith.constant -2 : i32
    %55 = vector.broadcast %c-2_i32 : i32 to vector<1x128xi32>
    %56 = arith.addi %24, %55 : vector<1x128xi32>
    %c0_i32_24 = arith.constant 0 : i32
    %57 = vector.broadcast %c0_i32_24 : i32 to vector<1x128xi32>
    %58 = arith.cmpi sge, %56, %57 : vector<1x128xi32>
    %c-2_i32_25 = arith.constant -2 : i32
    %59 = vector.broadcast %c-2_i32_25 : i32 to vector<1x128xi32>
    %60 = arith.addi %24, %59 : vector<1x128xi32>
    %c128_i32_26 = arith.constant 128 : i32
    %61 = vector.broadcast %c128_i32_26 : i32 to vector<1x128xi32>
    %62 = arith.cmpi slt, %60, %61 : vector<1x128xi32>
    %63 = arith.andi %58, %62 : vector<1x128xi1>
    %c2_i32 = arith.constant 2 : i32
    %64 = tpu.dynamic_rotate %54 by %c2_i32 dim 1 : vector<4x128xf32>, i32 -> vector<4x128xf32>
    %cst_27 = arith.constant 0.000000e+00 : f32
    %65 = vector.shape_cast %63 : vector<1x128xi1> to vector<1x128xi1>
    %66 = vector.broadcast %65 : vector<1x128xi1> to vector<4x128xi1>
    %67 = vector.broadcast %cst_27 : f32 to vector<4x128xf32>
    %68 = arith.select %66, %64, %67 : vector<4x128xi1>, vector<4x128xf32>
    %69 = arith.addf %47, %68 : vector<4x128xf32>
    %c2 = arith.constant 2 : index
    %70 = memref.load %arg4[%c2] : memref<14xf32, #tpu.memory_space<smem>>
    %71 = vector.broadcast %70 : f32 to vector<4x128xf32>
    %72 = arith.mulf %71, %22 : vector<4x128xf32>
    %c9 = arith.constant 9 : index
    %73 = memref.load %arg4[%c9] : memref<14xf32, #tpu.memory_space<smem>>
    %74 = vector.broadcast %73 : f32 to vector<4x128xf32>
    %75 = arith.mulf %74, %23 : vector<4x128xf32>
    %76 = arith.addf %72, %75 : vector<4x128xf32>
    %c-1_i32 = arith.constant -1 : i32
    %77 = vector.broadcast %c-1_i32 : i32 to vector<1x128xi32>
    %78 = arith.addi %24, %77 : vector<1x128xi32>
    %c0_i32_28 = arith.constant 0 : i32
    %79 = vector.broadcast %c0_i32_28 : i32 to vector<1x128xi32>
    %80 = arith.cmpi sge, %78, %79 : vector<1x128xi32>
    %c-1_i32_29 = arith.constant -1 : i32
    %81 = vector.broadcast %c-1_i32_29 : i32 to vector<1x128xi32>
    %82 = arith.addi %24, %81 : vector<1x128xi32>
    %c128_i32_30 = arith.constant 128 : i32
    %83 = vector.broadcast %c128_i32_30 : i32 to vector<1x128xi32>
    %84 = arith.cmpi slt, %82, %83 : vector<1x128xi32>
    %85 = arith.andi %80, %84 : vector<1x128xi1>
    %c1_i32 = arith.constant 1 : i32
    %86 = tpu.dynamic_rotate %76 by %c1_i32 dim 1 : vector<4x128xf32>, i32 -> vector<4x128xf32>
    %cst_31 = arith.constant 0.000000e+00 : f32
    %87 = vector.shape_cast %85 : vector<1x128xi1> to vector<1x128xi1>
    %88 = vector.broadcast %87 : vector<1x128xi1> to vector<4x128xi1>
    %89 = vector.broadcast %cst_31 : f32 to vector<4x128xf32>
    %90 = arith.select %88, %86, %89 : vector<4x128xi1>, vector<4x128xf32>
    %91 = arith.addf %69, %90 : vector<4x128xf32>
    %c3 = arith.constant 3 : index
    %92 = memref.load %arg4[%c3] : memref<14xf32, #tpu.memory_space<smem>>
    %93 = vector.broadcast %92 : f32 to vector<4x128xf32>
    %94 = arith.mulf %93, %22 : vector<4x128xf32>
    %c10 = arith.constant 10 : index
    %95 = memref.load %arg4[%c10] : memref<14xf32, #tpu.memory_space<smem>>
    %96 = vector.broadcast %95 : f32 to vector<4x128xf32>
    %97 = arith.mulf %96, %23 : vector<4x128xf32>
    %98 = arith.addf %94, %97 : vector<4x128xf32>
    %99 = arith.addf %91, %98 : vector<4x128xf32>
    %c4 = arith.constant 4 : index
    %100 = memref.load %arg4[%c4] : memref<14xf32, #tpu.memory_space<smem>>
    %101 = vector.broadcast %100 : f32 to vector<4x128xf32>
    %102 = arith.mulf %101, %22 : vector<4x128xf32>
    %c11 = arith.constant 11 : index
    %103 = memref.load %arg4[%c11] : memref<14xf32, #tpu.memory_space<smem>>
    %104 = vector.broadcast %103 : f32 to vector<4x128xf32>
    %105 = arith.mulf %104, %23 : vector<4x128xf32>
    %106 = arith.addf %102, %105 : vector<4x128xf32>
    %c1_i32_32 = arith.constant 1 : i32
    %107 = vector.broadcast %c1_i32_32 : i32 to vector<1x128xi32>
    %108 = arith.addi %24, %107 : vector<1x128xi32>
    %c0_i32_33 = arith.constant 0 : i32
    %109 = vector.broadcast %c0_i32_33 : i32 to vector<1x128xi32>
    %110 = arith.cmpi sge, %108, %109 : vector<1x128xi32>
    %c1_i32_34 = arith.constant 1 : i32
    %111 = vector.broadcast %c1_i32_34 : i32 to vector<1x128xi32>
    %112 = arith.addi %24, %111 : vector<1x128xi32>
    %c128_i32_35 = arith.constant 128 : i32
    %113 = vector.broadcast %c128_i32_35 : i32 to vector<1x128xi32>
    %114 = arith.cmpi slt, %112, %113 : vector<1x128xi32>
    %115 = arith.andi %110, %114 : vector<1x128xi1>
    %c127_i32 = arith.constant 127 : i32
    %116 = tpu.dynamic_rotate %106 by %c127_i32 dim 1 : vector<4x128xf32>, i32 -> vector<4x128xf32>
    %cst_36 = arith.constant 0.000000e+00 : f32
    %117 = vector.shape_cast %115 : vector<1x128xi1> to vector<1x128xi1>
    %118 = vector.broadcast %117 : vector<1x128xi1> to vector<4x128xi1>
    %119 = vector.broadcast %cst_36 : f32 to vector<4x128xf32>
    %120 = arith.select %118, %116, %119 : vector<4x128xi1>, vector<4x128xf32>
    %121 = arith.addf %99, %120 : vector<4x128xf32>
    %c5 = arith.constant 5 : index
    %122 = memref.load %arg4[%c5] : memref<14xf32, #tpu.memory_space<smem>>
    %123 = vector.broadcast %122 : f32 to vector<4x128xf32>
    %124 = arith.mulf %123, %22 : vector<4x128xf32>
    %c12 = arith.constant 12 : index
    %125 = memref.load %arg4[%c12] : memref<14xf32, #tpu.memory_space<smem>>
    %126 = vector.broadcast %125 : f32 to vector<4x128xf32>
    %127 = arith.mulf %126, %23 : vector<4x128xf32>
    %128 = arith.addf %124, %127 : vector<4x128xf32>
    %c2_i32_37 = arith.constant 2 : i32
    %129 = vector.broadcast %c2_i32_37 : i32 to vector<1x128xi32>
    %130 = arith.addi %24, %129 : vector<1x128xi32>
    %c0_i32_38 = arith.constant 0 : i32
    %131 = vector.broadcast %c0_i32_38 : i32 to vector<1x128xi32>
    %132 = arith.cmpi sge, %130, %131 : vector<1x128xi32>
    %c2_i32_39 = arith.constant 2 : i32
    %133 = vector.broadcast %c2_i32_39 : i32 to vector<1x128xi32>
    %134 = arith.addi %24, %133 : vector<1x128xi32>
    %c128_i32_40 = arith.constant 128 : i32
    %135 = vector.broadcast %c128_i32_40 : i32 to vector<1x128xi32>
    %136 = arith.cmpi slt, %134, %135 : vector<1x128xi32>
    %137 = arith.andi %132, %136 : vector<1x128xi1>
    %c126_i32 = arith.constant 126 : i32
    %138 = tpu.dynamic_rotate %128 by %c126_i32 dim 1 : vector<4x128xf32>, i32 -> vector<4x128xf32>
    %cst_41 = arith.constant 0.000000e+00 : f32
    %139 = vector.shape_cast %137 : vector<1x128xi1> to vector<1x128xi1>
    %140 = vector.broadcast %139 : vector<1x128xi1> to vector<4x128xi1>
    %141 = vector.broadcast %cst_41 : f32 to vector<4x128xf32>
    %142 = arith.select %140, %138, %141 : vector<4x128xi1>, vector<4x128xf32>
    %143 = arith.addf %121, %142 : vector<4x128xf32>
    %c6 = arith.constant 6 : index
    %144 = memref.load %arg4[%c6] : memref<14xf32, #tpu.memory_space<smem>>
    %145 = vector.broadcast %144 : f32 to vector<4x128xf32>
    %146 = arith.mulf %145, %22 : vector<4x128xf32>
    %c13 = arith.constant 13 : index
    %147 = memref.load %arg4[%c13] : memref<14xf32, #tpu.memory_space<smem>>
    %148 = vector.broadcast %147 : f32 to vector<4x128xf32>
    %149 = arith.mulf %148, %23 : vector<4x128xf32>
    %150 = arith.addf %146, %149 : vector<4x128xf32>
    %c3_i32_42 = arith.constant 3 : i32
    %151 = vector.broadcast %c3_i32_42 : i32 to vector<1x128xi32>
    %152 = arith.addi %24, %151 : vector<1x128xi32>
    %c0_i32_43 = arith.constant 0 : i32
    %153 = vector.broadcast %c0_i32_43 : i32 to vector<1x128xi32>
    %154 = arith.cmpi sge, %152, %153 : vector<1x128xi32>
    %c3_i32_44 = arith.constant 3 : i32
    %155 = vector.broadcast %c3_i32_44 : i32 to vector<1x128xi32>
    %156 = arith.addi %24, %155 : vector<1x128xi32>
    %c128_i32_45 = arith.constant 128 : i32
    %157 = vector.broadcast %c128_i32_45 : i32 to vector<1x128xi32>
    %158 = arith.cmpi slt, %156, %157 : vector<1x128xi32>
    %159 = arith.andi %154, %158 : vector<1x128xi1>
    %c125_i32 = arith.constant 125 : i32
    %160 = tpu.dynamic_rotate %150 by %c125_i32 dim 1 : vector<4x128xf32>, i32 -> vector<4x128xf32>
    %cst_46 = arith.constant 0.000000e+00 : f32
    %161 = vector.shape_cast %159 : vector<1x128xi1> to vector<1x128xi1>
    %162 = vector.broadcast %161 : vector<1x128xi1> to vector<4x128xi1>
    %163 = vector.broadcast %cst_46 : f32 to vector<4x128xf32>
    %164 = arith.select %162, %160, %163 : vector<4x128xi1>, vector<4x128xf32>
    %165 = arith.addf %143, %164 : vector<4x128xf32>
    %166 = arith.negf %165 : vector<4x128xf32>
    %167 = math.exp %166 : vector<4x128xf32>
    %cst_47 = arith.constant 1.000000e+00 : f32
    %168 = vector.broadcast %cst_47 : f32 to vector<4x128xf32>
    %169 = arith.addf %168, %167 : vector<4x128xf32>
    %170 = arith.divf %168, %169 : vector<4x128xf32>
    %171 = vector.shape_cast %170 : vector<4x128xf32> to vector<4x1x128xf32>
    %172 = vector.broadcast %171 : vector<4x1x128xf32> to vector<4x32x128xf32>
    %173 = arith.mulf %19, %172 : vector<4x32x128xf32>
    %c0_48 = arith.constant 0 : index
    %c0_49 = arith.constant 0 : index
    %c0_50 = arith.constant 0 : index
    %174 = vector.load %arg5[%c0_48, %c0_49, %c0_50] : memref<4x32x128xf32, #tpu.memory_space<vmem>>, vector<4x32x128xf32>
    tpu.vector_store %arg5[%c0_48, %c0_49, %c0_50], %173 {strides = array<i32>} : memref<4x32x128xf32, #tpu.memory_space<vmem>>, vector<4x32x128xf32>,
    return
  }
  func.func @transform_0(%arg0: i32) -> (i32, i32, i32) {
    %c0_i32 = arith.constant 0 : i32
    %c0_i32_0 = arith.constant 0 : i32
    %c0_i32_1 = arith.constant 0 : i32
    return %arg0, %c0_i32, %c0_i32_0 : i32, i32, i32
  }
  func.func @transform_1(%arg0: i32) -> (i32, i32) {
    %c0_i32 = arith.constant 0 : i32
    %c0_i32_0 = arith.constant 0 : i32
    %c0_i32_1 = arith.constant 0 : i32
    return %c0_i32, %c0_i32_0 : i32, i32
  }
  func.func @transform_2(%arg0: i32) -> (i32, i32) {
    %c0_i32 = arith.constant 0 : i32
    %c0_i32_0 = arith.constant 0 : i32
    %c0_i32_1 = arith.constant 0 : i32
    return %c0_i32, %c0_i32_0 : i32, i32
  }
  func.func @transform_3(%arg0: i32) -> i32 {
    %c0_i32 = arith.constant 0 : i32
    %c0_i32_0 = arith.constant 0 : i32
    return %c0_i32 : i32
  }
  func.func @transform_4(%arg0: i32) -> (i32, i32, i32) {
    %c0_i32 = arith.constant 0 : i32
    %c0_i32_0 = arith.constant 0 : i32
    %c0_i32_1 = arith.constant 0 : i32
    return %arg0, %c0_i32, %c0_i32_0 : i32, i32, i32
  }
}

</mosaic_0001>

<llo_original>
// kernel: tpu_custom_call.1
$region0: #{tpu_custom_call.1}
  #allocation0 [shape = 'u32[]', space=smem, size = 0x4, offset = 0x4, fixed_abs, tag = 'smem constant byte address 0x4 - core index']
  #allocation1 [shape = 'u32[144,128]{1,0:T(1,128)}', space=vmem, size = 0x12000, scoped, tag = 'internal scratch']
  %s0 = inlined_call_operand.hbm [shape: f32[16,32,128], index: 0, kind: input, shape index: {}]
  %s1 = inlined_call_operand.vmem [shape: f32[32,2], index: 1, kind: input, shape index: {}]
  %s2 = inlined_call_operand.vmem [shape: f32[2,32], index: 2, kind: input, shape index: {}]
  %s3 = inlined_call_operand.vmem [shape: f32[14], index: 3, kind: input, shape index: {}]
  %s4 = inlined_call_operand.hbm [shape: f32[16,32,128], index: 4, kind: output, shape index: {}]
  %s5 = sld [smem:[#allocation0]]
  $region57: #{tpu_custom_call.1} parent=0
    _
  %s7 = ssub.s32 1, %s5
  %s8 = scalar_select 0, %s7, %s5
  $region1: #{tpu_custom_call.1} parent=0
    #allocation2 [shape = 'u8[131072]{0}', space=vmem, size = 0x20000, scoped, tag = 'input window, operand 0']
    #allocation3 [shape = 's32[2]{0}', space=sflag, size = 0x8, scoped, tag = 'scoped memory for tpu_custom_call.1']
    #allocation4 [shape = 's32[2]{0}', space=sflag, size = 0x8, scoped, tag = 'scoped memory for tpu_custom_call.1']
    #allocation5 [shape = 's32[2]{0}', space=sflag, size = 0x8, scoped, tag = 'scoped memory for tpu_custom_call.1']
    #allocation6 [shape = 'u8[512]{0}', space=smem, size = 0x200, scoped, tag = 'input window, operand 3, single buffered']
    #allocation7 [shape = 'u8[131072]{0}', space=vmem, size = 0x20000, scoped, tag = 'output window, operand 0']
    %9 = vsyncpa [#allocation3], 0
    %s10 = scalar_lea.sflag [#allocation3], 1
    %11 = vsyncpa %s10, 0
    %12 = vsyncpa [#allocation5], 0
    %13 = vsyncpa [#allocation4], 0
    %s14 = scalar_lea.sflag [#allocation4], 1
    %15 = vsyncpa %s14, 0
    loop: start=0, step=1, limit=6
    $region2: #{tpu_custom_call.1} parent=1 // loop_pre_header
      _
    $region3: #{tpu_custom_call.1} parent=1 // loop_header
      %s17 = sphi 0, %s21
      %p18 = scmp.ge.s32.totalorder %s17, 6
      %s27 = sphi 0, %s29
      %s30 = sphi 0, %s27
      %s31 = sphi 0, %s30
      %s47 = sphi 0, %s31
      %s51 = sphi 0, %s51
      %s53 = sphi 0, %s51
      %s54 = sphi 0, %s53
      %s68 = sphi 0, %s54
      %s72 = sphi 0, %s72
      %s74 = sphi 0, %s72
      %s75 = sphi 0, %s74
      %s89 = sphi 0, %s75
      %s93 = sphi 0, %s93
      %s95 = sphi 0, %s93
      %s96 = sphi 0, %s95
      %s110 = sphi 0, %s96
      %s116 = sphi 0, %s118
      %s119 = sphi 0, %s116
      %s120 = sphi 0, %s119
      %s136 = sphi 0, %s120
    $region4: #{tpu_custom_call.1} parent=1 // loop_header_branch
      %20 = sbr.rel (%p18) target = $region8
    $region5: #{tpu_custom_call.1} parent=1 // loop_body
      %s22 = ssub.s32 %s17, 1
      %s23 = ssub.s32 %s17, 2
      %s24 = sadd.s32 %s17, 1
      %s25 = ssub.s32 %s17, %s24
      %p26 = scmp.eq.s32.totalorder %s25, 0
      %s28 = sadd.s32 %s27, 1
      %s29 = scalar_select %p26, %s27, %s28
      %p32 = pneg %p26
      %p33 = scmp.eq.s32.totalorder %s17, 3
      %p34 = por %p32, %p33
      %p35 = scmp.ne.s32.totalorder %s27, %s30
      %p36 = scmp.eq.s32.totalorder %s17, 0
      %p37 = por %p35, %p36
      %p38 = scmp.ne.s32.totalorder %s27, %s30
      %p39 = scmp.eq.s32.totalorder %s22, 3
      %p40 = por %p38, %p39
      %p41 = scmp.ne.s32.totalorder %s30, %s31
      %p42 = scmp.eq.s32.totalorder %s22, 0
      %p43 = por %p41, %p42
      %p44 = scmp.ne.s32.totalorder %s30, %s31
      %p45 = scmp.eq.s32.totalorder %s23, 3
      %p46 = por %p44, %p45
      %p48 = scmp.ne.s32.totalorder %s31, %s47
      %p49 = scmp.eq.s32.totalorder %s23, 0
      %p50 = por %p48, %p49
      %s52 = sadd.s32 %s51, 1
      %p55 = scmp.eq.s32.totalorder %s17, 3
      %p56 = scmp.ne.s32.totalorder %s51, %s53
      %p57 = scmp.eq.s32.totalorder %s17, 0
      %p58 = por %p56, %p57
      %p59 = scmp.ne.s32.totalorder %s51, %s53
      %p60 = scmp.eq.s32.totalorder %s22, 3
      %p61 = por %p59, %p60
      %p62 = scmp.ne.s32.totalorder %s53, %s54
      %p63 = scmp.eq.s32.totalorder %s22, 0
      %p64 = por %p62, %p63
      %p65 = scmp.ne.s32.totalorder %s53, %s54
      %p66 = scmp.eq.s32.totalorder %s23, 3
      %p67 = por %p65, %p66
      %p69 = scmp.ne.s32.totalorder %s54, %s68
      %p70 = scmp.eq.s32.totalorder %s23, 0
      %p71 = por %p69, %p70
      %s73 = sadd.s32 %s72, 1
      %p76 = scmp.eq.s32.totalorder %s17, 3
      %p77 = scmp.ne.s32.totalorder %s72, %s74
      %p78 = scmp.eq.s32.totalorder %s17, 0
      %p79 = por %p77, %p78
      %p80 = scmp.ne.s32.totalorder %s72, %s74
      %p81 = scmp.eq.s32.totalorder %s22, 3
      %p82 = por %p80, %p81
      %p83 = scmp.ne.s32.totalorder %s74, %s75
      %p84 = scmp.eq.s32.totalorder %s22, 0
      %p85 = por %p83, %p84
      %p86 = scmp.ne.s32.totalorder %s74, %s75
      %p87 = scmp.eq.s32.totalorder %s23, 3
      %p88 = por %p86, %p87
      %p90 = scmp.ne.s32.totalorder %s75, %s89
      %p91 = scmp.eq.s32.totalorder %s23, 0
      %p92 = por %p90, %p91
      %s94 = sadd.s32 %s93, 1
      %p97 = scmp.eq.s32.totalorder %s17, 3
      %p98 = scmp.ne.s32.totalorder %s93, %s95
      %p99 = scmp.eq.s32.totalorder %s17, 0
      %p100 = por %p98, %p99
      %p101 = scmp.ne.s32.totalorder %s93, %s95
      %p102 = scmp.eq.s32.totalorder %s22, 3
      %p103 = por %p101, %p102
      %p104 = scmp.ne.s32.totalorder %s95, %s96
      %p105 = scmp.eq.s32.totalorder %s22, 0
      %p106 = por %p104, %p105
      %p107 = scmp.ne.s32.totalorder %s95, %s96
      %p108 = scmp.eq.s32.totalorder %s23, 3
      %p109 = por %p107, %p108
      %p111 = scmp.ne.s32.totalorder %s96, %s110
      %p112 = scmp.eq.s32.totalorder %s23, 0
      %p113 = por %p111, %p112
      %s114 = ssub.s32 %s17, %s24
      %p115 = scmp.eq.s32.totalorder %s114, 0
      %s117 = sadd.s32 %s116, 1
      %s118 = scalar_select %p115, %s116, %s117
      %p121 = pneg %p115
      %p122 = scmp.eq.s32.totalorder %s17, 3
      %p123 = por %p121, %p122
      %p124 = scmp.ne.s32.totalorder %s116, %s119
      %p125 = scmp.eq.s32.totalorder %s17, 0
      %p126 = por %p124, %p125
      %p127 = scmp.ne.s32.totalorder %s116, %s119
      %p128 = scmp.eq.s32.totalorder %s22, 3
      %p129 = por %p127, %p128
      %p130 = scmp.ne.s32.totalorder %s119, %s120
      %p131 = scmp.eq.s32.totalorder %s22, 0
      %p132 = por %p130, %p131
      %p133 = scmp.ne.s32.totalorder %s119, %s120
      %p134 = scmp.eq.s32.totalorder %s23, 3
      %p135 = por %p133, %p134
      %p137 = scmp.ne.s32.totalorder %s120, %s136
      %p138 = scmp.eq.s32.totalorder %s23, 0
      %p139 = por %p137, %p138
      %p140 = scmp.le.s32.totalorder 1, %s17
      %p141 = scmp.lt.s32.totalorder %s17, 5
      %p142 = pnand %p140, %p141
      %p143 = pneg %p142
      // Predicated region
      $region9: #{tpu_custom_call.1} parent=5 // pred_check
        _
      $region10: #{tpu_custom_call.1} parent=5 // pred_check_branch
        %145 = sbr.rel (%p142) target = $region12
      $region11: #{tpu_custom_call.1} parent=5 // pred_region
        %s146 = ssub.s32 %s17, 1
        // Predicated region
        $region13: #{tpu_custom_call.1} parent=11 // pred_check
          %p147 = pneg %p64
        $region14: #{tpu_custom_call.1} parent=11 // pred_check_branch
          %149 = sbr.rel (%p147) target = $region16
        $region15: #{tpu_custom_call.1} parent=11 // pred_region
          _
        $region16: #{tpu_custom_call.1} parent=11 // pred_fallthru
          _
        // Predicated region
        $region17: #{tpu_custom_call.1} parent=11 // pred_check
          %p150 = pneg %p85
        $region18: #{tpu_custom_call.1} parent=11 // pred_check_branch
          %152 = sbr.rel (%p150) target = $region20
        $region19: #{tpu_custom_call.1} parent=11 // pred_region
          _
        $region20: #{tpu_custom_call.1} parent=11 // pred_fallthru
          _
        // Predicated region
        $region21: #{tpu_custom_call.1} parent=11 // pred_check
          %p153 = pneg %p106
        $region22: #{tpu_custom_call.1} parent=11 // pred_check_branch
          %155 = sbr.rel (%p153) target = $region24
        $region23: #{tpu_custom_call.1} parent=11 // pred_region
          %s157 = ssub.s32 16, 16
          %158 = vsyncadd [#allocation5], %s157
          %s160 = sshll.u32 %s3, 4
          %s161 = int_to_ptr.vmem [resolvable:$true] %s160
          %163 = dma.vmem_to_smem %s161, 16, [#allocation6], [#allocation5]
        $region24: #{tpu_custom_call.1} parent=11 // pred_fallthru
          _
      $region12: #{tpu_custom_call.1} parent=5 // pred_fallthru
        _
      %p164 = scmp.lt.s32.totalorder %s17, 4
      // Predicated region
      $region25: #{tpu_custom_call.1} parent=5 // pred_check
        %p165 = pneg %p164
      $region26: #{tpu_custom_call.1} parent=5 // pred_check_branch
        %167 = sbr.rel (%p165) target = $region28
      $region27: #{tpu_custom_call.1} parent=5 // pred_region
        // Predicated region
        $region29: #{tpu_custom_call.1} parent=27 // pred_check
          %p168 = pneg %p37
        $region30: #{tpu_custom_call.1} parent=27 // pred_check_branch
          %170 = sbr.rel (%p168) target = $region32
        $region31: #{tpu_custom_call.1} parent=27 // pred_region
          %s171 = sand.u32 %s27, 1
          %s172 = scalar_lea.sflag [#allocation3], %s171
          %s173 = sand.u32 %s27, 1
          %s174 = smul.addr %s173, 128
          %s175 = scalar_lea.vmem [#allocation2], %s174
          %s176 = smul.u32 4, %s17
          %s178 = ssub.s32 2048, 2048
          %179 = vsyncadd %s172, %s178
          %s180 = smul.addr %s176, 4
          %s181 = smul.addr %s180, 128
          %s182 = scalar_lea.hbm %s0, %s181
          %s183 = sshll.u32 %s175, 4
          %s184 = int_to_ptr.vmem [resolvable:$true] %s183
          %189 = dma.hbm_to_vmem [thread:$0]  %s182, 2048, %s184, %s172, 128, 128, 8
        $region32: #{tpu_custom_call.1} parent=27 // pred_fallthru
          _
      $region28: #{tpu_custom_call.1} parent=5 // pred_fallthru
        _
      %p190 = scmp.le.s32.totalorder 1, %s17
      %p191 = scmp.lt.s32.totalorder %s17, 5
      %p192 = pnand %p190, %p191
      %p193 = pneg %p192
      // Predicated region
      $region33: #{tpu_custom_call.1} parent=5 // pred_check
        _
      $region34: #{tpu_custom_call.1} parent=5 // pred_check_branch
        %195 = sbr.rel (%p192) target = $region36
      $region35: #{tpu_custom_call.1} parent=5 // pred_region
        %s196 = ssub.s32 %s17, 1
        %s197 = sand.u32 %s30, 1
        %s198 = scalar_lea.sflag [#allocation3], %s197
        %s199 = sand.u32 %s30, 1
        %s200 = smul.addr %s199, 128
        %s201 = scalar_lea.vmem [#allocation2], %s200
        // Predicated region
        $region37: #{tpu_custom_call.1} parent=35 // pred_check
          %p202 = pneg %p43
        $region38: #{tpu_custom_call.1} parent=35 // pred_check_branch
          %204 = sbr.rel (%p202) target = $region40
        $region39: #{tpu_custom_call.1} parent=35 // pred_region
          %205 = dma.done %s198, 2048
        $region40: #{tpu_custom_call.1} parent=35 // pred_fallthru
          _
        // Predicated region
        $region41: #{tpu_custom_call.1} parent=35 // pred_check
          %p206 = pneg %p106
        $region42: #{tpu_custom_call.1} parent=35 // pred_check_branch
          %208 = sbr.rel (%p206) target = $region44
        $region43: #{tpu_custom_call.1} parent=35 // pred_region
          %209 = dma.done [#allocation5], 16
        $region44: #{tpu_custom_call.1} parent=35 // pred_fallthru
          _
        %210 = sfence
        %s211 = sand.u32 %s30, 1
        %s212 = scalar_lea.sflag [#allocation3], %s211
        %s213 = sand.u32 %s30, 1
        %s214 = smul.addr %s213, 128
        %s215 = scalar_lea.vmem [#allocation2], %s214
        %p216 = pneg %p43
        %p217 = pneg %p40
        %p218 = pneg %p64
        %p219 = pneg %p61
        %p220 = pneg %p85
        %p221 = pneg %p82
        %p222 = pneg %p106
        %p223 = pneg %p103
        %p224 = pneg %p132
        %p225 = pneg %p129
        %s226 = sand.u32 %s119, 1
        %s227 = scalar_lea.sflag [#allocation4], %s226
        %s228 = sand.u32 %s119, 1
        %s229 = smul.addr %s228, 128
        %s230 = scalar_lea.vmem [#allocation7], %s229
        %s231 = smul.u32 4, %s22
        %s232 = smul.u32 4, %s22
        %v233 = vld [vmem:[%s201] sm:$0xff]
        %v234 = vld [vmem:[%s201 + $0x8] sm:$0xff]
        %v235 = vld [vmem:[%s201 + $0x10] sm:$0xff]
        %v236 = vld [vmem:[%s201 + $0x18] sm:$0xff]
        %v237 = vld [vmem:[%s201 + $0x20] sm:$0xff]
        %v238 = vld [vmem:[%s201 + $0x28] sm:$0xff]
        %v239 = vld [vmem:[%s201 + $0x30] sm:$0xff]
        %v240 = vld [vmem:[%s201 + $0x38] sm:$0xff]
        %v241 = vld [vmem:[%s201 + $0x40] sm:$0xff]
        %v242 = vld [vmem:[%s201 + $0x48] sm:$0xff]
        %v243 = vld [vmem:[%s201 + $0x50] sm:$0xff]
        %v244 = vld [vmem:[%s201 + $0x58] sm:$0xff]
        %v245 = vld [vmem:[%s201 + $0x60] sm:$0xff]
        %v246 = vld [vmem:[%s201 + $0x68] sm:$0xff]
        %v247 = vld [vmem:[%s201 + $0x70] sm:$0xff]
        %v248 = vld [vmem:[%s201 + $0x78] sm:$0xff]
        %249 = vadd.xlane.f32.xlu0 %v233
        %v250 = vpop.xlane.xlu0 %249
        %251 = vadd.xlane.f32.xlu0 %v234
        %v252 = vpop.xlane.xlu0 %251
        %253 = vadd.xlane.f32.xlu0 %v235
        %v254 = vpop.xlane.xlu0 %253
        %255 = vadd.xlane.f32.xlu0 %v236
        %v256 = vpop.xlane.xlu0 %255
        %257 = vadd.xlane.f32.xlu0 %v237
        %v258 = vpop.xlane.xlu0 %257
        %259 = vadd.xlane.f32.xlu0 %v238
        %v260 = vpop.xlane.xlu0 %259
        %261 = vadd.xlane.f32.xlu0 %v239
        %v262 = vpop.xlane.xlu0 %261
        %263 = vadd.xlane.f32.xlu0 %v240
        %v264 = vpop.xlane.xlu0 %263
        %265 = vadd.xlane.f32.xlu0 %v241
        %v266 = vpop.xlane.xlu0 %265
        %267 = vadd.xlane.f32.xlu0 %v242
        %v268 = vpop.xlane.xlu0 %267
        %269 = vadd.xlane.f32.xlu0 %v243
        %v270 = vpop.xlane.xlu0 %269
        %271 = vadd.xlane.f32.xlu0 %v244
        %v272 = vpop.xlane.xlu0 %271
        %273 = vadd.xlane.f32.xlu0 %v245
        %v274 = vpop.xlane.xlu0 %273
        %275 = vadd.xlane.f32.xlu0 %v246
        %v276 = vpop.xlane.xlu0 %275
        %277 = vadd.xlane.f32.xlu0 %v247
        %v278 = vpop.xlane.xlu0 %277
        %279 = vadd.xlane.f32.xlu0 %v248
        %v280 = vpop.xlane.xlu0 %279
        %v281 = vrcp.pop 128.0
        %v282 = vmul.f32 %v250, %v281
        %v283 = vmul.f32 %v252, %v281
        %v284 = vmul.f32 %v254, %v281
        %v285 = vmul.f32 %v256, %v281
        %v286 = vmul.f32 %v258, %v281
        %v287 = vmul.f32 %v260, %v281
        %v288 = vmul.f32 %v262, %v281
        %v289 = vmul.f32 %v264, %v281
        %v290 = vmul.f32 %v266, %v281
        %v291 = vmul.f32 %v268, %v281
        %v292 = vmul.f32 %v270, %v281
        %v293 = vmul.f32 %v272, %v281
        %v294 = vmul.f32 %v274, %v281
        %v295 = vmul.f32 %v276, %v281
        %v296 = vmul.f32 %v278, %v281
        %v297 = vmul.f32 %v280, %v281
        %v298 = vld [vmem:[%s1] sm:$0xff]
        %v299 = vld [vmem:[%s1 + $0x8] sm:$0xff]
        %v300 = vld [vmem:[%s1 + $0x10] sm:$0xff]
        %v301 = vld [vmem:[%s1 + $0x18] sm:$0xff]
        %v318 = vlaneseq
        %v319 = vand.u32 %v318, 127
        %v320 = vlaneseq
        %v321 = vshrl.u32 %v320, 7
        %v322 = vsub.s32 %v319, %v321
        %v323 = vrot.slane %v282, %v322
        %v324 = vadd.s32 %v319, 4294967288
        %v325 = vlaneseq
        %v326 = vshrl.u32 %v325, 7
        %v327 = vsub.s32 %v324, %v326
        %v328 = vrot.slane %v283, %v327
        %vm329 = vcmask 130112
        %v330 = vsel %vm329, %v328, %v323
        %v331 = vadd.s32 %v319, 4294967280
        %v332 = vlaneseq
        %v333 = vshrl.u32 %v332, 7
        %v334 = vsub.s32 %v331, %v333
        %v335 = vrot.slane %v284, %v334
        %vm336 = vcmask 195712
        %v337 = vsel %vm336, %v335, %v330
        %v338 = vadd.s32 %v319, 4294967272
        %v339 = vlaneseq
        %v340 = vshrl.u32 %v339, 7
        %v341 = vsub.s32 %v338, %v340
        %v342 = vrot.slane %v285, %v341
        %vm343 = vcmask 261312
        %v344 = vsel %vm343, %v342, %v337
        %v345 = vlaneseq
        %v346 = vshrl.u32 %v345, 7
        %v347 = vsub.s32 %v319, %v346
        %v348 = vrot.slane %v286, %v347
        %v349 = vlaneseq
        %v350 = vshrl.u32 %v349, 7
        %v351 = vsub.s32 %v324, %v350
        %v352 = vrot.slane %v287, %v351
        %v353 = vsel %vm329, %v352, %v348
        %v354 = vlaneseq
        %v355 = vshrl.u32 %v354, 7
        %v356 = vsub.s32 %v331, %v355
        %v357 = vrot.slane %v288, %v356
        %v358 = vsel %vm336, %v357, %v353
        %v359 = vlaneseq
        %v360 = vshrl.u32 %v359, 7
        %v361 = vsub.s32 %v338, %v360
        %v362 = vrot.slane %v289, %v361
        %v363 = vsel %vm343, %v362, %v358
        %v364 = vlaneseq
        %v365 = vshrl.u32 %v364, 7
        %v366 = vsub.s32 %v319, %v365
        %v367 = vrot.slane %v290, %v366
        %v368 = vlaneseq
        %v369 = vshrl.u32 %v368, 7
        %v370 = vsub.s32 %v324, %v369
        %v371 = vrot.slane %v291, %v370
        %v372 = vsel %vm329, %v371, %v367
        %v373 = vlaneseq
        %v374 = vshrl.u32 %v373, 7
        %v375 = vsub.s32 %v331, %v374
        %v376 = vrot.slane %v292, %v375
        %v377 = vsel %vm336, %v376, %v372
        %v378 = vlaneseq
        %v379 = vshrl.u32 %v378, 7
        %v380 = vsub.s32 %v338, %v379
        %v381 = vrot.slane %v293, %v380
        %v382 = vsel %vm343, %v381, %v377
        %v383 = vlaneseq
        %v384 = vshrl.u32 %v383, 7
        %v385 = vsub.s32 %v319, %v384
        %v386 = vrot.slane %v294, %v385
        %v387 = vlaneseq
        %v388 = vshrl.u32 %v387, 7
        %v389 = vsub.s32 %v324, %v388
        %v390 = vrot.slane %v295, %v389
        %v391 = vsel %vm329, %v390, %v386
        %v392 = vlaneseq
        %v393 = vshrl.u32 %v392, 7
        %v394 = vsub.s32 %v331, %v393
        %v395 = vrot.slane %v296, %v394
        %v396 = vsel %vm336, %v395, %v391
        %v397 = vlaneseq
        %v398 = vshrl.u32 %v397, 7
        %v399 = vsub.s32 %v338, %v398
        %v400 = vrot.slane %v297, %v399
        %v401 = vsel %vm343, %v400, %v396
        %vm402 = vcmask 1041409
        %v403 = vsel %vm402, %v363, %v344
        %vm404 = vcmask 1042434
        %v405 = vsel %vm404, %v382, %v403
        %vm406 = vcmask 1043459
        %v407 = vsel %vm406, %v401, %v405
        %vm408 = vcmask 261120
        %v409 = vsel %vm408, %v407, 0
        %411 = vmatprep.subr.mxu0 0.0
        %412 = vmatpush1.msra.mxu0 %v298
        %413 = vmatprep.subr.mxu0 0.0
        %414 = vmatpush1.msra.mxu0 %v299
        %415 = vmatprep.subr.mxu0 0.0
        %416 = vmatpush1.msra.mxu0 %v300
        %417 = vmatprep.subr.mxu0 0.0
        %418 = vmatpush1.msra.mxu0 %v301
        %419 = vmatprep.subr.mxu0 0.0
        %420 = vmatpush1.msra.mxu0 0.0
        %421 = vmatprep.subr.mxu0 0.0
        %422 = vmatpush1.msra.mxu0 0.0
        %423 = vmatprep.subr.mxu0 0.0
        %424 = vmatpush1.msra.mxu0 0.0
        %425 = vmatprep.subr.mxu0 0.0
        %426 = vmatpush1.msra.mxu0 0.0
        %427 = vmatprep.subr.mxu0 0.0
        %428 = vmatpush1.msra.mxu0 0.0
        %429 = vmatprep.subr.mxu0 0.0
        %430 = vmatpush1.msra.mxu0 0.0
        %431 = vmatprep.subr.mxu0 0.0
        %432 = vmatpush1.msra.mxu0 0.0
        %433 = vmatprep.subr.mxu0 0.0
        %434 = vmatpush1.msra.mxu0 0.0
        %435 = vmatprep.subr.mxu0 0.0
        %436 = vmatpush1.msra.mxu0 0.0
        %437 = vmatprep.subr.mxu0 0.0
        %438 = vmatpush1.msra.mxu0 0.0
        %439 = vmatprep.subr.mxu0 0.0
        %440 = vmatpush1.msra.mxu0 0.0
        %441 = vmatprep.subr.mxu0 0.0
        %442 = vmatpush1.msra.mxu0 0.0
        %443 = vmatprep.subr.mxu0 0.0
        %444 = vmatpush1.msra.mxu0 0.0
        %445 = vmatprep.subr.mxu0 0.0
        %446 = vmatpush1.msra.mxu0 0.0
        %447 = vmatprep.subr.mxu0 0.0
        %448 = vmatpush1.msra.mxu0 0.0
        %449 = vmatprep.subr.mxu0 0.0
        %450 = vmatpush1.msra.mxu0 0.0
        %451 = vmatprep.subr.mxu0 0.0
        %452 = vmatpush1.msra.mxu0 0.0
        %453 = vmatprep.subr.mxu0 0.0
        %454 = vmatpush1.msra.mxu0 0.0
        %455 = vmatprep.subr.mxu0 0.0
        %456 = vmatpush1.msra.mxu0 0.0
        %457 = vmatprep.subr.mxu0 0.0
        %458 = vmatpush1.msra.mxu0 0.0
        %459 = vmatprep.subr.mxu0 0.0
        %460 = vmatpush1.msra.mxu0 0.0
        %461 = vmatprep.subr.mxu0 0.0
        %462 = vmatpush1.msra.mxu0 0.0
        %463 = vmatprep.subr.mxu0 0.0
        %464 = vmatpush1.msra.mxu0 0.0
        %465 = vmatprep.subr.mxu0 0.0
        %466 = vmatpush1.msra.mxu0 0.0
        %467 = vmatprep.subr.mxu0 0.0
        %468 = vmatpush1.msra.mxu0 0.0
        %469 = vmatprep.subr.mxu0 0.0
        %470 = vmatpush1.msra.mxu0 0.0
        %471 = vmatprep.subr.mxu0 0.0
        %472 = vmatpush1.msra.mxu0 0.0
        %473 = vmatprep.subr.mxu0 0.0
        %474 = vmatpush1.msra.mxu0 0.0
        %475 = vmatprep.mubr.f32.mxu0 0.0
        %476 = vmatmul.mubr.f32.gmra.mrb[0].mxu0 %v409
        %v477 = vpop.f32.mrb[0].mxu0
        %v478 = vadd.f32 0.0, %v477
        %v479 = vpop.f32.mrb[0].mxu0
        %480 = vdwg.mxu0
        %v481 = vmax.f32 %v478, 0.0
        %v482 = vld [vmem:[%s2] sm:$0x3]
        %vm483 = vcmask 15360
        %v485 = vsel %vm483, %v481, 0
        %vm487 = vcmask 1041408
        %v489 = vsel %vm487, %v482, 0
        %491 = vmatprep.subr.mxu0 0.0
        %492 = vmatpush1.msra.mxu0 %v489
        %493 = vmatprep.subr.mxu0 0.0
        %494 = vmatpush1.msra.mxu0 0.0
        %495 = vmatprep.subr.mxu0 0.0
        %496 = vmatpush1.msra.mxu0 0.0
        %497 = vmatprep.subr.mxu0 0.0
        %498 = vmatpush1.msra.mxu0 0.0
        %499 = vmatprep.subr.mxu0 0.0
        %500 = vmatpush1.msra.mxu0 0.0
        %501 = vmatprep.subr.mxu0 0.0
        %502 = vmatpush1.msra.mxu0 0.0
        %503 = vmatprep.subr.mxu0 0.0
        %504 = vmatpush1.msra.mxu0 0.0
        %505 = vmatprep.subr.mxu0 0.0
        %506 = vmatpush1.msra.mxu0 0.0
        %507 = vmatprep.subr.mxu0 0.0
        %508 = vmatpush1.msra.mxu0 0.0
        %509 = vmatprep.subr.mxu0 0.0
        %510 = vmatpush1.msra.mxu0 0.0
        %511 = vmatprep.subr.mxu0 0.0
        %512 = vmatpush1.msra.mxu0 0.0
        %513 = vmatprep.subr.mxu0 0.0
        %514 = vmatpush1.msra.mxu0 0.0
        %515 = vmatprep.subr.mxu0 0.0
        %516 = vmatpush1.msra.mxu0 0.0
        %517 = vmatprep.subr.mxu0 0.0
        %518 = vmatpush1.msra.mxu0 0.0
        %519 = vmatprep.subr.mxu0 0.0
        %520 = vmatpush1.msra.mxu0 0.0
        %521 = vmatprep.subr.mxu0 0.0
        %522 = vmatpush1.msra.mxu0 0.0
        %523 = vmatprep.subr.mxu0 0.0
        %524 = vmatpush1.msra.mxu0 0.0
        %525 = vmatprep.subr.mxu0 0.0
        %526 = vmatpush1.msra.mxu0 0.0
        %527 = vmatprep.subr.mxu0 0.0
        %528 = vmatpush1.msra.mxu0 0.0
        %529 = vmatprep.subr.mxu0 0.0
        %530 = vmatpush1.msra.mxu0 0.0
        %531 = vmatprep.subr.mxu0 0.0
        %532 = vmatpush1.msra.mxu0 0.0
        %533 = vmatprep.subr.mxu0 0.0
        %534 = vmatpush1.msra.mxu0 0.0
        %535 = vmatprep.subr.mxu0 0.0
        %536 = vmatpush1.msra.mxu0 0.0
        %537 = vmatprep.subr.mxu0 0.0
        %538 = vmatpush1.msra.mxu0 0.0
        %539 = vmatprep.subr.mxu0 0.0
        %540 = vmatpush1.msra.mxu0 0.0
        %541 = vmatprep.subr.mxu0 0.0
        %542 = vmatpush1.msra.mxu0 0.0
        %543 = vmatprep.subr.mxu0 0.0
        %544 = vmatpush1.msra.mxu0 0.0
        %545 = vmatprep.subr.mxu0 0.0
        %546 = vmatpush1.msra.mxu0 0.0
        %547 = vmatprep.subr.mxu0 0.0
        %548 = vmatpush1.msra.mxu0 0.0
        %549 = vmatprep.subr.mxu0 0.0
        %550 = vmatpush1.msra.mxu0 0.0
        %551 = vmatprep.subr.mxu0 0.0
        %552 = vmatpush1.msra.mxu0 0.0
        %553 = vmatprep.subr.mxu0 0.0
        %554 = vmatpush1.msra.mxu0 0.0
        %555 = vmatprep.mubr.f32.mxu0 0.0
        %556 = vmatmul.mubr.f32.gmra.mrb[0].mxu0 %v485
        %v557 = vpop.f32.mrb[0].mxu0
        %v558 = vadd.f32 0.0, %v557
        %v559 = vpop.f32.mrb[0].mxu0
        %560 = vdwg.mxu0
        %v561 = vxor.u32 %v558, 2147483648
        %v562 = vmul.f32 %v561, 1.442695
        %v563 = vpow.pop %v562
        %v564 = vadd.f32 %v563, 1.0
        %v565 = vrcp.pop %v564
        %v566 = vmul.f32 1.0, %v565
        %v567 = vlaneseq
        %v568 = vshrl.u32 %v567, 7
        %v569 = vsub.s32 0, %v568
        %v570 = vrot.slane %v566, %v569
        %572 = vbcast.lane.b32.xlu0 %v570, 256
        %v573 = vpop.permute.xlu0 %572
        %s575 = sor.u32 256, 8
        %576 = vbcast.lane.b32.xlu0 %v570, %s575
        %v577 = vpop.permute.xlu0 %576
        %s579 = sor.u32 256, 16
        %580 = vbcast.lane.b32.xlu0 %v570, %s579
        %v581 = vpop.permute.xlu0 %580
        %s583 = sor.u32 256, 24
        %584 = vbcast.lane.b32.xlu0 %v570, %s583
        %v585 = vpop.permute.xlu0 %584
        %v586 = vlaneseq
        %v587 = vshrl.u32 %v586, 7
        %v588 = vsub.s32 1, %v587
        %v589 = vrot.slane %v566, %v588
        %591 = vbcast.lane.b32.xlu0 %v589, 256
        %v592 = vpop.permute.xlu0 %591
        %s594 = sor.u32 256, 8
        %595 = vbcast.lane.b32.xlu0 %v589, %s594
        %v596 = vpop.permute.xlu0 %595
        %s598 = sor.u32 256, 16
        %599 = vbcast.lane.b32.xlu0 %v589, %s598
        %v600 = vpop.permute.xlu0 %599
        %s602 = sor.u32 256, 24
        %603 = vbcast.lane.b32.xlu0 %v589, %s602
        %v604 = vpop.permute.xlu0 %603
        %v605 = vlaneseq
        %v606 = vshrl.u32 %v605, 7
        %v607 = vsub.s32 2, %v606
        %v608 = vrot.slane %v566, %v607
        %610 = vbcast.lane.b32.xlu0 %v608, 256
        %v611 = vpop.permute.xlu0 %610
        %s613 = sor.u32 256, 8
        %614 = vbcast.lane.b32.xlu0 %v608, %s613
        %v615 = vpop.permute.xlu0 %614
        %s617 = sor.u32 256, 16
        %618 = vbcast.lane.b32.xlu0 %v608, %s617
        %v619 = vpop.permute.xlu0 %618
        %s621 = sor.u32 256, 24
        %622 = vbcast.lane.b32.xlu0 %v608, %s621
        %v623 = vpop.permute.xlu0 %622
        %v624 = vlaneseq
        %v625 = vshrl.u32 %v624, 7
        %v626 = vsub.s32 3, %v625
        %v627 = vrot.slane %v566, %v626
        %629 = vbcast.lane.b32.xlu0 %v627, 256
        %v630 = vpop.permute.xlu0 %629
        %s632 = sor.u32 256, 8
        %633 = vbcast.lane.b32.xlu0 %v627, %s632
        %v634 = vpop.permute.xlu0 %633
        %s636 = sor.u32 256, 16
        %637 = vbcast.lane.b32.xlu0 %v627, %s636
        %v638 = vpop.permute.xlu0 %637
        %s640 = sor.u32 256, 24
        %641 = vbcast.lane.b32.xlu0 %v627, %s640
        %v642 = vpop.permute.xlu0 %641
        %v643 = vmul.f32 %v233, %v573
        %v644 = vmul.f32 %v234, %v577
        %v645 = vmul.f32 %v235, %v581
        %v646 = vmul.f32 %v236, %v585
        %v647 = vmul.f32 %v237, %v592
        %v648 = vmul.f32 %v238, %v596
        %v649 = vmul.f32 %v239, %v600
        %v650 = vmul.f32 %v240, %v604
        %v651 = vmul.f32 %v241, %v611
        %v652 = vmul.f32 %v242, %v615
        %v653 = vmul.f32 %v243, %v619
        %v654 = vmul.f32 %v244, %v623
        %v655 = vmul.f32 %v245, %v630
        %v656 = vmul.f32 %v246, %v634
        %v657 = vmul.f32 %v247, %v638
        %v658 = vmul.f32 %v248, %v642
        %659 = vst [vmem:[%s230] sm:$0xff] %v643
        %660 = vst [vmem:[%s230 + $0x8] sm:$0xff] %v644
        %661 = vst [vmem:[%s230 + $0x10] sm:$0xff] %v645
        %662 = vst [vmem:[%s230 + $0x18] sm:$0xff] %v646
        %663 = vst [vmem:[%s230 + $0x20] sm:$0xff] %v647
        %664 = vst [vmem:[%s230 + $0x28] sm:$0xff] %v648
        %665 = vst [vmem:[%s230 + $0x30] sm:$0xff] %v649
        %666 = vst [vmem:[%s230 + $0x38] sm:$0xff] %v650
        %667 = vst [vmem:[%s230 + $0x40] sm:$0xff] %v651
        %668 = vst [vmem:[%s230 + $0x48] sm:$0xff] %v652
        %669 = vst [vmem:[%s230 + $0x50] sm:$0xff] %v653
        %670 = vst [vmem:[%s230 + $0x58] sm:$0xff] %v654
        %671 = vst [vmem:[%s230 + $0x60] sm:$0xff] %v655
        %672 = vst [vmem:[%s230 + $0x68] sm:$0xff] %v656
        %673 = vst [vmem:[%s230 + $0x70] sm:$0xff] %v657
        %674 = vst [vmem:[%s230 + $0x78] sm:$0xff] %v658
        %v675 = vld [vmem:[%s230] sm:$0xff]
        %v676 = vld [vmem:[%s230 + $0x8] sm:$0xff]
        %v677 = vld [vmem:[%s230 + $0x10] sm:$0xff]
        %v678 = vld [vmem:[%s230 + $0x18] sm:$0xff]
        %v679 = vld [vmem:[%s230 + $0x20] sm:$0xff]
        %v680 = vld [vmem:[%s230 + $0x28] sm:$0xff]
        %v681 = vld [vmem:[%s230 + $0x30] sm:$0xff]
        %v682 = vld [vmem:[%s230 + $0x38] sm:$0xff]
        %v683 = vld [vmem:[%s230 + $0x40] sm:$0xff]
        %v684 = vld [vmem:[%s230 + $0x48] sm:$0xff]
        %v685 = vld [vmem:[%s230 + $0x50] sm:$0xff]
        %v686 = vld [vmem:[%s230 + $0x58] sm:$0xff]
        %v687 = vld [vmem:[%s230 + $0x60] sm:$0xff]
        %v688 = vld [vmem:[%s230 + $0x68] sm:$0xff]
        %v689 = vld [vmem:[%s230 + $0x70] sm:$0xff]
        %v690 = vld [vmem:[%s230 + $0x78] sm:$0xff]
        %v691 = vadd.f32 %v675, %v676
        %v692 = vadd.f32 %v691, %v677
        %v693 = vadd.f32 %v692, %v678
        %v694 = vrot.slane %v693, 4
        %v695 = vadd.f32 %v693, %v694
        %v696 = vrot.slane %v695, 2
        %v697 = vadd.f32 %v695, %v696
        %v698 = vrot.slane %v697, 1
        %v699 = vadd.f32 %v697, %v698
        %v700 = vadd.f32 %v679, %v680
        %v701 = vadd.f32 %v700, %v681
        %v702 = vadd.f32 %v701, %v682
        %v703 = vrot.slane %v702, 4
        %v704 = vadd.f32 %v702, %v703
        %v705 = vrot.slane %v704, 2
        %v706 = vadd.f32 %v704, %v705
        %v707 = vrot.slane %v706, 1
        %v708 = vadd.f32 %v706, %v707
        %v709 = vadd.f32 %v683, %v684
        %v710 = vadd.f32 %v709, %v685
        %v711 = vadd.f32 %v710, %v686
        %v712 = vrot.slane %v711, 4
        %v713 = vadd.f32 %v711, %v712
        %v714 = vrot.slane %v713, 2
        %v715 = vadd.f32 %v713, %v714
        %v716 = vrot.slane %v715, 1
        %v717 = vadd.f32 %v715, %v716
        %v718 = vadd.f32 %v687, %v688
        %v719 = vadd.f32 %v718, %v689
        %v720 = vadd.f32 %v719, %v690
        %v721 = vrot.slane %v720, 4
        %v722 = vadd.f32 %v720, %v721
        %v723 = vrot.slane %v722, 2
        %v724 = vadd.f32 %v722, %v723
        %v725 = vrot.slane %v724, 1
        %v726 = vadd.f32 %v724, %v725
        %v727 = vrcp.pop 32.0
        %v728 = vmul.f32 %v699, %v727
        %v729 = vmul.f32 %v708, %v727
        %v730 = vmul.f32 %v717, %v727
        %v731 = vmul.f32 %v726, %v727
        %v732 = vmax.f32 %v675, %v676
        %v733 = vmax.f32 %v732, %v677
        %v734 = vmax.f32 %v733, %v678
        %v735 = vrot.slane %v734, 4
        %v736 = vmax.f32 %v734, %v735
        %v737 = vrot.slane %v736, 2
        %v738 = vmax.f32 %v736, %v737
        %v739 = vrot.slane %v738, 1
        %v740 = vmax.f32 %v738, %v739
        %v741 = vmax.f32 %v679, %v680
        %v742 = vmax.f32 %v741, %v681
        %v743 = vmax.f32 %v742, %v682
        %v744 = vrot.slane %v743, 4
        %v745 = vmax.f32 %v743, %v744
        %v746 = vrot.slane %v745, 2
        %v747 = vmax.f32 %v745, %v746
        %v748 = vrot.slane %v747, 1
        %v749 = vmax.f32 %v747, %v748
        %v750 = vmax.f32 %v683, %v684
        %v751 = vmax.f32 %v750, %v685
        %v752 = vmax.f32 %v751, %v686
        %v753 = vrot.slane %v752, 4
        %v754 = vmax.f32 %v752, %v753
        %v755 = vrot.slane %v754, 2
        %v756 = vmax.f32 %v754, %v755
        %v757 = vrot.slane %v756, 1
        %v758 = vmax.f32 %v756, %v757
        %v759 = vmax.f32 %v687, %v688
        %v760 = vmax.f32 %v759, %v689
        %v761 = vmax.f32 %v760, %v690
        %v762 = vrot.slane %v761, 4
        %v763 = vmax.f32 %v761, %v762
        %v764 = vrot.slane %v763, 2
        %v765 = vmax.f32 %v763, %v764
        %v766 = vrot.slane %v765, 1
        %v767 = vmax.f32 %v765, %v766
        %s768 = sld [smem:[#allocation6]]
        %v769 = vstv %s768
        %v770 = vmul.f32 %v769, %v728
        %v771 = vmul.f32 %v769, %v729
        %v772 = vmul.f32 %v769, %v730
        %v773 = vmul.f32 %v769, %v731
        %s774 = sld [smem:[#allocation6 + $0x7]]
        %v775 = vstv %s774
        %v776 = vmul.f32 %v775, %v740
        %v777 = vmul.f32 %v775, %v749
        %v778 = vmul.f32 %v775, %v758
        %v779 = vmul.f32 %v775, %v767
        %v780 = vadd.f32 %v770, %v776
        %v781 = vadd.f32 %v771, %v777
        %v782 = vadd.f32 %v772, %v778
        %v783 = vadd.f32 %v773, %v779
        %v784 = vadd.s32 %v319, 4294967293
        %vm785 = vcmp.ge.s32.totalorder %v784, 0
        %vm786 = vcmp.lt.s32.totalorder %v784, 128
        %vm787 = vmand %vm785, %vm786
        %v792 = vsel %vm402, %v781, %v780
        %v793 = vsel %vm404, %v782, %v792
        %v794 = vsel %vm406, %v783, %v793
        %796 = vrot.lane.b32.xlu0 %v794, 3
        %v797 = vpop.permute.xlu0 %796
        %v798 = vsel %vm787, 1, 0
        %vm799 = vcmp.eq.s32.totalorder %v798, 1
        %v800 = vsel %vm799, %v797, 0.0
        %v801 = vadd.f32 %v800, 0.0
        %s802 = sld [smem:[#allocation6 + $0x1]]
        %v803 = vstv %s802
        %v804 = vmul.f32 %v803, %v728
        %v805 = vmul.f32 %v803, %v729
        %v806 = vmul.f32 %v803, %v730
        %v807 = vmul.f32 %v803, %v731
        %s808 = sld [smem:[#allocation6 + $0x8]]
        %v809 = vstv %s808
        %v810 = vmul.f32 %v809, %v740
        %v811 = vmul.f32 %v809, %v749
        %v812 = vmul.f32 %v809, %v758
        %v813 = vmul.f32 %v809, %v767
        %v814 = vadd.f32 %v804, %v810
        %v815 = vadd.f32 %v805, %v811
        %v816 = vadd.f32 %v806, %v812
        %v817 = vadd.f32 %v807, %v813
        %v818 = vadd.s32 %v319, 4294967294
        %vm819 = vcmp.ge.s32.totalorder %v818, 0
        %vm820 = vcmp.lt.s32.totalorder %v818, 128
        %vm821 = vmand %vm819, %vm820
        %v826 = vsel %vm402, %v815, %v814
        %v827 = vsel %vm404, %v816, %v826
        %v828 = vsel %vm406, %v817, %v827
        %830 = vrot.lane.b32.xlu0 %v828, 2
        %v831 = vpop.permute.xlu0 %830
        %v832 = vsel %vm821, 1, 0
        %vm833 = vcmp.eq.s32.totalorder %v832, 1
        %v834 = vsel %vm833, %v831, 0.0
        %v835 = vadd.f32 %v801, %v834
        %s836 = sld [smem:[#allocation6 + $0x2]]
        %v837 = vstv %s836
        %v838 = vmul.f32 %v837, %v728
        %v839 = vmul.f32 %v837, %v729
        %v840 = vmul.f32 %v837, %v730
        %v841 = vmul.f32 %v837, %v731
        %s842 = sld [smem:[#allocation6 + $0x9]]
        %v843 = vstv %s842
        %v844 = vmul.f32 %v843, %v740
        %v845 = vmul.f32 %v843, %v749
        %v846 = vmul.f32 %v843, %v758
        %v847 = vmul.f32 %v843, %v767
        %v848 = vadd.f32 %v838, %v844
        %v849 = vadd.f32 %v839, %v845
        %v850 = vadd.f32 %v840, %v846
        %v851 = vadd.f32 %v841, %v847
        %v852 = vadd.s32 %v319, 4294967295
        %vm853 = vcmp.ge.s32.totalorder %v852, 0
        %vm854 = vcmp.lt.s32.totalorder %v852, 128
        %vm855 = vmand %vm853, %vm854
        %v860 = vsel %vm402, %v849, %v848
        %v861 = vsel %vm404, %v850, %v860
        %v862 = vsel %vm406, %v851, %v861
        %864 = vrot.lane.b32.xlu0 %v862, 1
        %v865 = vpop.permute.xlu0 %864
        %v866 = vsel %vm855, 1, 0
        %vm867 = vcmp.eq.s32.totalorder %v866, 1
        %v868 = vsel %vm867, %v865, 0.0
        %v869 = vadd.f32 %v835, %v868
        %s870 = sld [smem:[#allocation6 + $0x3]]
        %v871 = vstv %s870
        %v872 = vmul.f32 %v871, %v728
        %v873 = vmul.f32 %v871, %v729
        %v874 = vmul.f32 %v871, %v730
        %v875 = vmul.f32 %v871, %v731
        %s876 = sld [smem:[#allocation6 + $0xa]]
        %v877 = vstv %s876
        %v878 = vmul.f32 %v877, %v740
        %v879 = vmul.f32 %v877, %v749
        %v880 = vmul.f32 %v877, %v758
        %v881 = vmul.f32 %v877, %v767
        %v882 = vadd.f32 %v872, %v878
        %v883 = vadd.f32 %v873, %v879
        %v884 = vadd.f32 %v874, %v880
        %v885 = vadd.f32 %v875, %v881
        %v890 = vsel %vm402, %v883, %v882
        %v891 = vsel %vm404, %v884, %v890
        %v892 = vsel %vm406, %v885, %v891
        %v894 = vadd.f32 %v869, %v892
        %s895 = sld [smem:[#allocation6 + $0x4]]
        %v896 = vstv %s895
        %v897 = vmul.f32 %v896, %v728
        %v898 = vmul.f32 %v896, %v729
        %v899 = vmul.f32 %v896, %v730
        %v900 = vmul.f32 %v896, %v731
        %s901 = sld [smem:[#allocation6 + $0xb]]
        %v902 = vstv %s901
        %v903 = vmul.f32 %v902, %v740
        %v904 = vmul.f32 %v902, %v749
        %v905 = vmul.f32 %v902, %v758
        %v906 = vmul.f32 %v902, %v767
        %v907 = vadd.f32 %v897, %v903
        %v908 = vadd.f32 %v898, %v904
        %v909 = vadd.f32 %v899, %v905
        %v910 = vadd.f32 %v900, %v906
        %v911 = vadd.s32 %v319, 1
        %vm912 = vcmp.ge.s32.totalorder %v911, 0
        %vm913 = vcmp.lt.s32.totalorder %v911, 128
        %vm914 = vmand %vm912, %vm913
        %v919 = vsel %vm402, %v908, %v907
        %v920 = vsel %vm404, %v909, %v919
        %v921 = vsel %vm406, %v910, %v920
        %923 = vrot.lane.b32.xlu0 %v921, 127
        %v924 = vpop.permute.xlu0 %923
        %v925 = vsel %vm914, 1, 0
        %vm926 = vcmp.eq.s32.totalorder %v925, 1
        %v927 = vsel %vm926, %v924, 0.0
        %v928 = vadd.f32 %v894, %v927
        %s929 = sld [smem:[#allocation6 + $0x5]]
        %v930 = vstv %s929
        %v931 = vmul.f32 %v930, %v728
        %v932 = vmul.f32 %v930, %v729
        %v933 = vmul.f32 %v930, %v730
        %v934 = vmul.f32 %v930, %v731
        %s935 = sld [smem:[#allocation6 + $0xc]]
        %v936 = vstv %s935
        %v937 = vmul.f32 %v936, %v740
        %v938 = vmul.f32 %v936, %v749
        %v939 = vmul.f32 %v936, %v758
        %v940 = vmul.f32 %v936, %v767
        %v941 = vadd.f32 %v931, %v937
        %v942 = vadd.f32 %v932, %v938
        %v943 = vadd.f32 %v933, %v939
        %v944 = vadd.f32 %v934, %v940
        %v945 = vadd.s32 %v319, 2
        %vm946 = vcmp.ge.s32.totalorder %v945, 0
        %vm947 = vcmp.lt.s32.totalorder %v945, 128
        %vm948 = vmand %vm946, %vm947
        %v953 = vsel %vm402, %v942, %v941
        %v954 = vsel %vm404, %v943, %v953
        %v955 = vsel %vm406, %v944, %v954
        %957 = vrot.lane.b32.xlu0 %v955, 126
        %v958 = vpop.permute.xlu0 %957
        %v959 = vsel %vm948, 1, 0
        %vm960 = vcmp.eq.s32.totalorder %v959, 1
        %v961 = vsel %vm960, %v958, 0.0
        %v962 = vadd.f32 %v928, %v961
        %s963 = sld [smem:[#allocation6 + $0x6]]
        %v964 = vstv %s963
        %v965 = vmul.f32 %v964, %v728
        %v966 = vmul.f32 %v964, %v729
        %v967 = vmul.f32 %v964, %v730
        %v968 = vmul.f32 %v964, %v731
        %s969 = sld [smem:[#allocation6 + $0xd]]
        %v970 = vstv %s969
        %v971 = vmul.f32 %v970, %v740
        %v972 = vmul.f32 %v970, %v749
        %v973 = vmul.f32 %v970, %v758
        %v974 = vmul.f32 %v970, %v767
        %v975 = vadd.f32 %v965, %v971
        %v976 = vadd.f32 %v966, %v972
        %v977 = vadd.f32 %v967, %v973
        %v978 = vadd.f32 %v968, %v974
        %v979 = vadd.s32 %v319, 3
        %vm980 = vcmp.ge.s32.totalorder %v979, 0
        %vm981 = vcmp.lt.s32.totalorder %v979, 128
        %vm982 = vmand %vm980, %vm981
        %v987 = vsel %vm402, %v976, %v975
        %v988 = vsel %vm404, %v977, %v987
        %v989 = vsel %vm406, %v978, %v988
        %991 = vrot.lane.b32.xlu0 %v989, 125
        %v992 = vpop.permute.xlu0 %991
        %v993 = vsel %vm982, 1, 0
        %vm994 = vcmp.eq.s32.totalorder %v993, 1
        %v995 = vsel %vm994, %v992, 0.0
        %v996 = vadd.f32 %v962, %v995
        %v997 = vxor.u32 %v996, 2147483648
        %v998 = vmul.f32 %v997, 1.442695
        %v999 = vpow.pop %v998
        %v1000 = vadd.f32 %v999, 1.0
        %v1001 = vrcp.pop %v1000
        %v1002 = vmul.f32 1.0, %v1001
        %v1005 = vunpack.c.l.s4 1966171168
        %v1006 = vunpack.c.0.s8 %v1005
        %v1007 = vlaneseq
        %v1008 = vshrl.u32 %v1007, 7
        %v1009 = vsub.s32 %v1006, %v1008
        %v1010 = vrot.slane %v1002, %v1009
        %v1011 = vcombine.high %v1010, %v1010
        %v1013 = vunpack.c.l.s4 1966171168
        %v1014 = vunpack.c.0.s8 %v1013
        %v1015 = vlaneseq
        %v1016 = vshrl.u32 %v1015, 7
        %v1017 = vsub.s32 %v1014, %v1016
        %v1018 = vrot.slane %v1010, %v1017
        %v1020 = vunpack.c.l.s4 1966171168
        %v1021 = vunpack.c.0.s8 %v1020
        %v1022 = vlaneseq
        %v1023 = vshrl.u32 %v1022, 7
        %v1024 = vsub.s32 %v1021, %v1023
        %v1025 = vrot.slane %v1011, %v1024
        %v1026 = vcombine.high %v1018, %v1018
        %v1027 = vcombine.high %v1025, %v1025
        %v1028 = vlaneseq
        %v1029 = vshrl.u32 %v1028, 7
        %v1030 = vsub.s32 0, %v1029
        %v1031 = vrot.slane %v1018, %v1030
        %v1032 = vlaneseq
        %v1033 = vshrl.u32 %v1032, 7
        %v1034 = vsub.s32 0, %v1033
        %v1035 = vrot.slane %v1025, %v1034
        %v1036 = vlaneseq
        %v1037 = vshrl.u32 %v1036, 7
        %v1038 = vsub.s32 0, %v1037
        %v1039 = vrot.slane %v1026, %v1038
        %v1040 = vlaneseq
        %v1041 = vshrl.u32 %v1040, 7
        %v1042 = vsub.s32 0, %v1041
        %v1043 = vrot.slane %v1027, %v1042
        %v1048 = vmul.f32 %v675, %v1031
        %v1049 = vmul.f32 %v676, %v1031
        %v1050 = vmul.f32 %v677, %v1031
        %v1051 = vmul.f32 %v678, %v1031
        %v1052 = vmul.f32 %v679, %v1035
        %v1053 = vmul.f32 %v680, %v1035
        %v1054 = vmul.f32 %v681, %v1035
        %v1055 = vmul.f32 %v682, %v1035
        %v1056 = vmul.f32 %v683, %v1039
        %v1057 = vmul.f32 %v684, %v1039
        %v1058 = vmul.f32 %v685, %v1039
        %v1059 = vmul.f32 %v686, %v1039
        %v1060 = vmul.f32 %v687, %v1043
        %v1061 = vmul.f32 %v688, %v1043
        %v1062 = vmul.f32 %v689, %v1043
        %v1063 = vmul.f32 %v690, %v1043
        %1064 = vst [vmem:[%s230] sm:$0xff] %v1048
        %1065 = vst [vmem:[%s230 + $0x8] sm:$0xff] %v1049
        %1066 = vst [vmem:[%s230 + $0x10] sm:$0xff] %v1050
        %1067 = vst [vmem:[%s230 + $0x18] sm:$0xff] %v1051
        %1068 = vst [vmem:[%s230 + $0x20] sm:$0xff] %v1052
        %1069 = vst [vmem:[%s230 + $0x28] sm:$0xff] %v1053
        %1070 = vst [vmem:[%s230 + $0x30] sm:$0xff] %v1054
        %1071 = vst [vmem:[%s230 + $0x38] sm:$0xff] %v1055
        %1072 = vst [vmem:[%s230 + $0x40] sm:$0xff] %v1056
        %1073 = vst [vmem:[%s230 + $0x48] sm:$0xff] %v1057
        %1074 = vst [vmem:[%s230 + $0x50] sm:$0xff] %v1058
        %1075 = vst [vmem:[%s230 + $0x58] sm:$0xff] %v1059
        %1076 = vst [vmem:[%s230 + $0x60] sm:$0xff] %v1060
        %1077 = vst [vmem:[%s230 + $0x68] sm:$0xff] %v1061
        %1078 = vst [vmem:[%s230 + $0x70] sm:$0xff] %v1062
        %1079 = vst [vmem:[%s230 + $0x78] sm:$0xff] %v1063
        %s1080 = sand.u32 %s119, 1
        %s1081 = scalar_lea.sflag [#allocation4], %s1080
        %s1082 = sand.u32 %s119, 1
        %s1083 = smul.addr %s1082, 128
        %s1084 = scalar_lea.vmem [#allocation7], %s1083
        // Predicated region
        $region45: #{tpu_custom_call.1} parent=35 // pred_check
          %p1085 = pneg %p129
        $region46: #{tpu_custom_call.1} parent=35 // pred_check_branch
          %1087 = sbr.rel (%p1085) target = $region48
        $region47: #{tpu_custom_call.1} parent=35 // pred_region
          %s1088 = smul.u32 4, %s22
          %s1090 = ssub.s32 2048, 2048
          %1091 = vsyncadd %s1081, %s1090
          %s1092 = smul.addr %s1088, 4
          %s1093 = smul.addr %s1092, 128
          %s1094 = scalar_lea.hbm %s4, %s1093
          %s1095 = sshll.u32 %s1084, 4
          %s1096 = int_to_ptr.vmem [resolvable:$true] %s1095
          %1101 = dma.vmem_to_hbm [thread:$0]  %s1096, 2048, %s1094, %s1081, 128, 128, 8
        $region48: #{tpu_custom_call.1} parent=35 // pred_fallthru
          _
      $region36: #{tpu_custom_call.1} parent=5 // pred_fallthru
        _
      %p1102 = scmp.le.s32.totalorder 2, %s17
      // Predicated region
      $region49: #{tpu_custom_call.1} parent=5 // pred_check
        %p1103 = pneg %p1102
      $region50: #{tpu_custom_call.1} parent=5 // pred_check_branch
        %1105 = sbr.rel (%p1103) target = $region52
      $region51: #{tpu_custom_call.1} parent=5 // pred_region
        %s1106 = ssub.s32 %s17, 2
        // Predicated region
        $region53: #{tpu_custom_call.1} parent=51 // pred_check
          %p1107 = pneg %p135
        $region54: #{tpu_custom_call.1} parent=51 // pred_check_branch
          %1109 = sbr.rel (%p1107) target = $region56
        $region55: #{tpu_custom_call.1} parent=51 // pred_region
          %s1110 = sand.u32 %s120, 1
          %s1111 = scalar_lea.sflag [#allocation4], %s1110
          %s1112 = sand.u32 %s120, 1
          %s1113 = smul.addr %s1112, 128
          %s1114 = scalar_lea.vmem [#allocation7], %s1113
          %1115 = dma.done %s1111, 2048
        $region56: #{tpu_custom_call.1} parent=51 // pred_fallthru
          _
      $region52: #{tpu_custom_call.1} parent=5 // pred_fallthru
        _
    $region6: #{tpu_custom_call.1} parent=1 // loop_footer
      %s21 = sadd.s32 1, %s17
    $region7: #{tpu_custom_call.1} parent=1 // loop_footer_branch
      %16 = sbr.rel target = $region3
    $region8: #{tpu_custom_call.1} parent=1 // loop_exit
      _
    %1116 = vsyncpa [#allocation3], 1
    %s1117 = scalar_lea.sflag [#allocation3], 1
    %1118 = vsyncpa %s1117, 1
    %1119 = vsyncpa [#allocation4], 1
    %s1120 = scalar_lea.sflag [#allocation4], 1
    %1121 = vsyncpa %s1120, 1
    %1122 = vsyncpa [#allocation5], 1
    %s1123 = scalar_lea.sflag [#allocation5], 1
    %1124 = vsyncpa %s1123, 1

</llo_original>
